<compile_context>
chip_gen: v6e
topology: v6e:2x2x1
jax: 0.10.0
libtpu: 0.0.40
codegen_flags: <defaults>
</compile_context>

<pallas_src>
import jax
import jax.numpy as jnp
from jax.experimental import pallas as pl
from jax.experimental.pallas import tpu as pltpu


def _round_up(x, m):
    return ((x + m - 1) // m) * m


def make_textcnn_kernel(kernel_sizes, batch_tile, row_stride, embed_dim,
                        kernel_num, compute_dtype):
    D, C, Bt, R = embed_dim, kernel_num, batch_tile, row_stride
    n = len(kernel_sizes)
    f_max = max(kernel_sizes)
    M = Bt * R  # matmul M dimension: batch tile folded into the time axis

    def kernel(x_ref, wc_ref, bc_ref, mask_ref, wh_ref, bh_ref, out_ref):
        # x_ref   : (Bt*R + tail, D)   flattened, padded batch tile
        # wc_ref  : (f_max*D, n*C)     conv weights, zero-padded to f_max taps
        # bc_ref  : (1, n*C)           packed conv biases
        # mask_ref: (R, n*C)           0 where the window is valid, -1e30 elsewhere
        # wh_ref  : (n*C, 2*D)         packed linear heads, eval-BN folded in
        # bh_ref  : (1, 2*D)
        # out_ref : (Bt, 2*D)          [mu | std], lane-dense
        #
        # im2col: one (M, f_max*D) @ (f_max*D, n*C) MXU matmul covers every
        # filter size (shorter filters see zero weight rows for extra taps).
        cols = jnp.concatenate([x_ref[k:k + M, :] for k in range(f_max)], axis=1)
        acc = jnp.dot(cols, wc_ref[...], preferred_element_type=jnp.float32)  # (M, n*C)

        # Per-sequence global max over valid windows only (invalid positions are
        # pushed to -1e30 by the additive mask). Slices are sublane-aligned.
        mask = mask_ref[...]
        pooled = jnp.concatenate(
            [jnp.max(acc[b * R:(b + 1) * R, :] + mask, axis=0, keepdims=True)
             for b in range(Bt)],
            axis=0)                                                  # (Bt, n*C)

        # Bias + ReLU after the max: exact (bias time-invariant, ReLU monotone).
        feat = jnp.maximum(pooled + bc_ref[...], 0.0)                # (Bt, n*C)
        # TODO(synk): Dropout is identity (eval mode); training-mode dropout and
        # batch-statistics BatchNorm are not modeled.
        y = jnp.dot(feat.astype(compute_dtype), wh_ref[...],
                    preferred_element_type=jnp.float32) + bh_ref[...]  # (Bt, 2*D)

        # [mu | exp(0.5*logvar)] via lane select (no lane slicing/concat).
        lane = jax.lax.broadcasted_iota(jnp.int32, (Bt, 2 * D), 1)
        out_ref[...] = jnp.where(lane < D, y, jnp.exp(0.5 * y))

    return kernel


def textcnn_forward(embedded, params, kernel_sizes, kernel_num, bn_eps=1e-5,
                    batch_tile=None, compute_dtype=jnp.float32):
    """Eval-mode TextCnn forward pass. Returns (mu, std)."""
    kernel_sizes = tuple(kernel_sizes)
    B, S, D = embedded.shape
    n = len(kernel_sizes)
    C = kernel_num
    f_max = max(kernel_sizes)
    padded_len = S + 4                       # Conv2d padding=(2, 0) on the time axis
    R = _round_up(padded_len, 8)             # per-sequence row stride (sublane aligned)
    TAIL = _round_up(max(f_max - 1, 1), 8)   # scratch rows so every tap slice is in-bounds

    if batch_tile is None:
        batch_tile = B
    assert B % batch_tile == 0, "batch must be divisible by batch_tile"
    num_tiles = B // batch_tile
    tile_rows = batch_tile * R + TAIL

    # ---- host-side layout plumbing (exact; no compute-semantics change) -------
    x = embedded.astype(jnp.float32)
    x = jnp.pad(x, ((0, 0), (2, R - S - 2), (0, 0)))          # (B, R, D): conv pad + align
    x = x.reshape(num_tiles, batch_tile * R, D)               # fold batch into the M axis
    x = jnp.pad(x, ((0, 0), (0, TAIL), (0, 0))).astype(compute_dtype)

    # Conv weights (C, f, D) -> (f, D, C) -> (f*D, C), zero-padded to f_max taps and
    # packed over filter sizes into one (f_max*D, n*C) matrix.
    w_conv = jnp.zeros((f_max * D, n * C), jnp.float32)
    for j, f in enumerate(kernel_sizes):
        Wf = jnp.transpose(params[f"conv_w_{f}"], (1, 2, 0)).reshape(f * D, C)
        w_conv = w_conv.at[:f * D, j * C:(j + 1) * C].set(Wf)
    w_conv = w_conv.astype(compute_dtype)
    b_conv = jnp.concatenate(
        [params[f"conv_b_{f}"].reshape(1, C) for f in kernel_sizes], axis=1)  # (1, n*C)

    # Additive pooling mask: 0 for valid window positions t < padded_len - f + 1
    # of each filter's column group, -1e30 elsewhere.
    t_idx = jnp.arange(R, dtype=jnp.int32)[:, None]                           # (R, 1)
    out_lens = jnp.concatenate(
        [jnp.full((C,), padded_len - f + 1, jnp.int32) for f in kernel_sizes])  # (n*C,)
    pool_mask = jnp.where(t_idx < out_lens[None, :], 0.0, -1e30).astype(jnp.float32)

    # Fold eval-mode BatchNorm1d into each linear head, pack both heads together.
    def fold_head(name):
        W = params[f"w_{name}"]                    # (D, n*C): PyTorch (out, in) layout
        b = params[f"b_{name}"]                    # (D,)
        gamma, beta, rmean, rvar = params[f"bn_{name}"]
        scale = gamma * jax.lax.rsqrt(rvar + bn_eps)
        return W.T * scale[None, :], (b - rmean) * scale + beta

    Wmu, bmu = fold_head("mu")
    Wlv, blv = fold_head("lv")
    w_heads = jnp.concatenate([Wmu, Wlv], axis=1).astype(compute_dtype)   # (n*C, 2*D)
    b_heads = jnp.concatenate([bmu, blv], axis=0).reshape(1, 2 * D).astype(jnp.float32)

    kernel = make_textcnn_kernel(kernel_sizes, batch_tile, R, D, C, compute_dtype)

    out = pl.pallas_call(
        kernel,
        grid=(num_tiles,),
        in_specs=[
            pl.BlockSpec((None, tile_rows, D), lambda i: (i, 0, 0)),      # x tile
            pl.BlockSpec((f_max * D, n * C), lambda i: (0, 0)),           # packed conv W
            pl.BlockSpec((1, n * C), lambda i: (0, 0)),                   # packed conv b
            pl.BlockSpec((R, n * C), lambda i: (0, 0)),                   # pooling mask
            pl.BlockSpec((n * C, 2 * D), lambda i: (0, 0)),               # folded heads W
            pl.BlockSpec((1, 2 * D), lambda i: (0, 0)),                   # folded heads b
        ],
        out_specs=pl.BlockSpec((None, batch_tile, 2 * D), lambda i: (i, 0, 0)),
        out_shape=jax.ShapeDtypeStruct((num_tiles, batch_tile, 2 * D), jnp.float32),
        compiler_params=pltpu.CompilerParams(dimension_semantics=("parallel",)),
    )(x, w_conv, b_conv, pool_mask, w_heads, b_heads)

    out = out.reshape(B, 2 * D)
    return out[:, :D], out[:, D:]


def init_params(key, embed_dim, kernel_num, kernel_sizes):
    """PyTorch-layout parameters for TextCnn (eval mode BN stats)."""
    D, C, n = embed_dim, kernel_num, len(kernel_sizes)
    params = {}
    keys = jax.random.split(key, 2 * n + 4)
    ki = 0
    for f in kernel_sizes:
        params[f"conv_w_{f}"] = 0.1 * jax.random.normal(keys[ki], (C, f, D), jnp.float32)
        ki += 1
        params[f"conv_b_{f}"] = 0.1 * jax.random.normal(keys[ki], (C,), jnp.float32)
        ki += 1
    for name in ("mu", "lv"):
        params[f"w_{name}"] = 0.1 * jax.random.normal(keys[ki], (D, n * C), jnp.float32)
        ki += 1
        params[f"b_{name}"] = 0.1 * jax.random.normal(keys[ki], (D,), jnp.float32)
        ki += 1
        # BatchNorm1d defaults: gamma=1, beta=0, running_mean=0, running_var=1
        params[f"bn_{name}"] = (jnp.ones((D,), jnp.float32),
                                jnp.zeros((D,), jnp.float32),
                                jnp.zeros((D,), jnp.float32),
                                jnp.ones((D,), jnp.float32))
    return params


def textcnn_reference(embedded, params, kernel_sizes, kernel_num, bn_eps=1e-5):
    """Pure-JAX reference matching the PyTorch module in eval mode."""
    B, S, D = embedded.shape
    xp = jnp.pad(embedded, ((0, 0), (2, 2), (0, 0)))
    pooled = []
    for f in kernel_sizes:
        W = params[f"conv_w_{f}"]                  # (C, f, D)
        b = params[f"conv_b_{f}"]                  # (C,)
        out_len = S + 4 - f + 1
        conv = sum(jnp.einsum("bld,cd->blc", xp[:, k:k + out_len, :], W[:, k, :])
                   for k in range(f)) + b
        conv = jax.nn.relu(conv)
        pooled.append(jnp.max(conv, axis=1))       # (B, C)
    feat = jnp.concatenate(pooled, axis=1)         # dropout = identity in eval mode

    def head(name):
        W = params[f"w_{name}"]
        bb = params[f"b_{name}"]
        gamma, beta, rmean, rvar = params[f"bn_{name}"]
        y = feat @ W.T + bb
        return (y - rmean) * gamma * jax.lax.rsqrt(rvar + bn_eps) + beta

    mu = head("mu")
    logvar = head("lv")
    return mu, jnp.exp(0.5 * logvar)


if __name__ == "__main__":
    embed_dim = 32
    kernel_num = 8
    kernel_sizes = (3, 4, 5)
    batch, seq_len = 4, 16

    key = jax.random.PRNGKey(0)
    k_x, k_p = jax.random.split(key)
    embedded = jax.random.normal(k_x, (batch, seq_len, embed_dim), jnp.float32)
    params = init_params(k_p, embed_dim, kernel_num, kernel_sizes)

    # batch_tile=2 -> two independent "parallel" grid steps (megacore friendly).
    mu, std = textcnn_forward(embedded, params, kernel_sizes, kernel_num, batch_tile=2)
    jax.block_until_ready((mu, std))
    assert mu.shape == (batch, embed_dim) and std.shape == (batch, embed_dim)

    mu_ref, std_ref = textcnn_reference(embedded, params, kernel_sizes, kernel_num)
    err = max(float(jnp.max(jnp.abs(mu - mu_ref))),
              float(jnp.max(jnp.abs(std - std_ref))))
    assert err < 5e-2, f"mismatch vs reference: max abs err {err}"
    print("KERNEL_OK")
</pallas_src>

<mosaic_0001>
module attributes {stable_mosaic.version = 11 : i64} {
  func.func @kernel(%arg0: i32, %arg1: memref<1x56x32xf32, #tpu.memory_space<vmem>>, %arg2: memref<160x24xf32, #tpu.memory_space<vmem>>, %arg3: memref<1x24xf32, #tpu.memory_space<vmem>>, %arg4: memref<24x24xf32, #tpu.memory_space<vmem>>, %arg5: memref<24x64xf32, #tpu.memory_space<vmem>>, %arg6: memref<1x64xf32, #tpu.memory_space<vmem>>, %arg7: memref<1x2x64xf32, #tpu.memory_space<vmem>>) attributes {dimension_semantics = [#tpu.dimension_semantics<parallel>], iteration_bounds = array<i64: 2>, scalar_prefetch = 0 : i64, scratch_operands = 0 : i64, tpu.core_type = #tpu.core_type<tc>, window_params = [{transform_indices = @transform_0, window_bounds = array<i64: 1, 56, 32>}, {pipeline_mode = #tpu.pipeline_mode<synchronous>, transform_indices = @transform_1, window_bounds = array<i64: 160, 24>}, {pipeline_mode = #tpu.pipeline_mode<synchronous>, transform_indices = @transform_2, window_bounds = array<i64: 1, 24>}, {pipeline_mode = #tpu.pipeline_mode<synchronous>, transform_indices = @transform_3, window_bounds = array<i64: 24, 24>}, {pipeline_mode = #tpu.pipeline_mode<synchronous>, transform_indices = @transform_4, window_bounds = array<i64: 24, 64>}, {pipeline_mode = #tpu.pipeline_mode<synchronous>, transform_indices = @transform_5, window_bounds = array<i64: 1, 64>}, {transform_indices = @transform_6, window_bounds = array<i64: 1, 2, 64>}]} {
    %c0 = arith.constant 0 : index
    %c0_0 = arith.constant 0 : index
    %c0_1 = arith.constant 0 : index
    %0 = vector.load %arg1[%c0, %c0_0, %c0_1] : memref<1x56x32xf32, #tpu.memory_space<vmem>>, vector<1x48x32xf32>
    %1 = vector.shape_cast %0 : vector<1x48x32xf32> to vector<48x32xf32>
    %c0_2 = arith.constant 0 : index
    %c1 = arith.constant 1 : index
    %c0_3 = arith.constant 0 : index
    %2 = vector.load %arg1[%c0_2, %c1, %c0_3] : memref<1x56x32xf32, #tpu.memory_space<vmem>>, vector<1x48x32xf32>
    %3 = vector.shape_cast %2 : vector<1x48x32xf32> to vector<48x32xf32>
    %c0_4 = arith.constant 0 : index
    %c2 = arith.constant 2 : index
    %c0_5 = arith.constant 0 : index
    %4 = vector.load %arg1[%c0_4, %c2, %c0_5] : memref<1x56x32xf32, #tpu.memory_space<vmem>>, vector<1x48x32xf32>
    %5 = vector.shape_cast %4 : vector<1x48x32xf32> to vector<48x32xf32>
    %c0_6 = arith.constant 0 : index
    %c3 = arith.constant 3 : index
    %c0_7 = arith.constant 0 : index
    %6 = vector.load %arg1[%c0_6, %c3, %c0_7] : memref<1x56x32xf32, #tpu.memory_space<vmem>>, vector<1x48x32xf32>
    %7 = vector.shape_cast %6 : vector<1x48x32xf32> to vector<48x32xf32>
    %c0_8 = arith.constant 0 : index
    %c4 = arith.constant 4 : index
    %c0_9 = arith.constant 0 : index
    %8 = vector.load %arg1[%c0_8, %c4, %c0_9] : memref<1x56x32xf32, #tpu.memory_space<vmem>>, vector<1x48x32xf32>
    %9 = vector.shape_cast %8 : vector<1x48x32xf32> to vector<48x32xf32>
    %10 = tpu.concatenate %1, %3, %5, %7, %9 in 1 : vector<48x32xf32>, vector<48x32xf32>, vector<48x32xf32>, vector<48x32xf32>, vector<48x32xf32> -> vector<48x160xf32>
    %c0_10 = arith.constant 0 : index
    %c0_11 = arith.constant 0 : index
    %11 = vector.load %arg2[%c0_10, %c0_11] : memref<160x24xf32, #tpu.memory_space<vmem>>, vector<160x24xf32>
    %cst = arith.constant dense<0.000000e+00> : vector<48x24xf32>
    %12 = tpu.matmul %10, %11, %cst {dimension_numbers = #tpu.dot_dimension_numbers<[1], [0], [0], [1], [0, 0, 1, 1], [], []>} : vector<48x160xf32>, vector<160x24xf32>, vector<48x24xf32> -> vector<48x24xf32>
    %c0_12 = arith.constant 0 : index
    %c0_13 = arith.constant 0 : index
    %13 = vector.load %arg4[%c0_12, %c0_13] : memref<24x24xf32, #tpu.memory_space<vmem>>, vector<24x24xf32>
    %14 = vector.extract_strided_slice %12 {offsets = [0, 0], sizes = [24, 24], strides = [1, 1]} : vector<48x24xf32> to vector<24x24xf32>
    %15 = arith.addf %14, %13 : vector<24x24xf32>
    %cst_14 = arith.constant dense<0xFF800000> : vector<24xf32>
    %16 = vector.multi_reduction <maximumf>, %15, %cst_14 [0] : vector<24x24xf32> to vector<24xf32>
    %17 = vector.shape_cast %16 : vector<24xf32> to vector<1x24xf32>
    %18 = vector.extract_strided_slice %12 {offsets = [24, 0], sizes = [24, 24], strides = [1, 1]} : vector<48x24xf32> to vector<24x24xf32>
    %19 = arith.addf %18, %13 : vector<24x24xf32>
    %cst_15 = arith.constant dense<0xFF800000> : vector<24xf32>
    %20 = vector.multi_reduction <maximumf>, %19, %cst_15 [0] : vector<24x24xf32> to vector<24xf32>
    %21 = vector.shape_cast %20 : vector<24xf32> to vector<1x24xf32>
    %22 = tpu.concatenate %17, %21 in 0 : vector<1x24xf32>, vector<1x24xf32> -> vector<2x24xf32>
    %c0_16 = arith.constant 0 : index
    %c0_17 = arith.constant 0 : index
    %23 = vector.load %arg3[%c0_16, %c0_17] : memref<1x24xf32, #tpu.memory_space<vmem>>, vector<1x24xf32>
    %24 = vector.broadcast %23 : vector<1x24xf32> to vector<2x24xf32>
    %25 = arith.addf %22, %24 : vector<2x24xf32>
    %cst_18 = arith.constant 0.000000e+00 : f32
    %26 = vector.broadcast %cst_18 : f32 to vector<2x24xf32>
    %27 = arith.maximumf %25, %26 : vector<2x24xf32>
    %c0_19 = arith.constant 0 : index
    %c0_20 = arith.constant 0 : index
    %28 = vector.load %arg5[%c0_19, %c0_20] : memref<24x64xf32, #tpu.memory_space<vmem>>, vector<24x64xf32>
    %cst_21 = arith.constant dense<0.000000e+00> : vector<2x64xf32>
    %29 = tpu.matmul %27, %28, %cst_21 {dimension_numbers = #tpu.dot_dimension_numbers<[1], [0], [0], [1], [0, 0, 1, 1], [], []>} : vector<2x24xf32>, vector<24x64xf32>, vector<2x64xf32> -> vector<2x64xf32>
    %c0_22 = arith.constant 0 : index
    %c0_23 = arith.constant 0 : index
    %30 = vector.load %arg6[%c0_22, %c0_23] : memref<1x64xf32, #tpu.memory_space<vmem>>, vector<1x64xf32>
    %31 = vector.broadcast %30 : vector<1x64xf32> to vector<2x64xf32>
    %32 = arith.addf %29, %31 : vector<2x64xf32>
    %33 = tpu.iota {dimensions = array<i32: 1>} : vector<2x64xi32>
    %c32_i32 = arith.constant 32 : i32
    %34 = vector.broadcast %c32_i32 : i32 to vector<2x64xi32>
    %35 = arith.cmpi slt, %33, %34 : vector<2x64xi32>
    %cst_24 = arith.constant 5.000000e-01 : f32
    %36 = vector.broadcast %cst_24 : f32 to vector<2x64xf32>
    %37 = arith.mulf %36, %32 : vector<2x64xf32>
    %38 = math.exp %37 : vector<2x64xf32>
    %39 = arith.select %35, %32, %38 : vector<2x64xi1>, vector<2x64xf32>
    %c0_25 = arith.constant 0 : index
    %c0_26 = arith.constant 0 : index
    %c0_27 = arith.constant 0 : index
    %40 = vector.load %arg7[%c0_25, %c0_26, %c0_27] : memref<1x2x64xf32, #tpu.memory_space<vmem>>, vector<1x2x64xf32>
    %41 = vector.shape_cast %40 : vector<1x2x64xf32> to vector<2x64xf32>
    %42 = vector.shape_cast %39 : vector<2x64xf32> to vector<1x2x64xf32>
    tpu.vector_store %arg7[%c0_25, %c0_26, %c0_27], %42 {strides = array<i32>} : memref<1x2x64xf32, #tpu.memory_space<vmem>>, vector<1x2x64xf32>,
    return
  }
  func.func @transform_0(%arg0: i32) -> (i32, i32, i32) {
    %c0_i32 = arith.constant 0 : i32
    %c0_i32_0 = arith.constant 0 : i32
    %c0_i32_1 = arith.constant 0 : i32
    return %arg0, %c0_i32, %c0_i32_0 : i32, i32, i32
  }
  func.func @transform_1(%arg0: i32) -> (i32, i32) {
    %c0_i32 = arith.constant 0 : i32
    %c0_i32_0 = arith.constant 0 : i32
    %c0_i32_1 = arith.constant 0 : i32
    return %c0_i32, %c0_i32_0 : i32, i32
  }
  func.func @transform_2(%arg0: i32) -> (i32, i32) {
    %c0_i32 = arith.constant 0 : i32
    %c0_i32_0 = arith.constant 0 : i32
    %c0_i32_1 = arith.constant 0 : i32
    return %c0_i32, %c0_i32_0 : i32, i32
  }
  func.func @transform_3(%arg0: i32) -> (i32, i32) {
    %c0_i32 = arith.constant 0 : i32
    %c0_i32_0 = arith.constant 0 : i32
    %c0_i32_1 = arith.constant 0 : i32
    return %c0_i32, %c0_i32_0 : i32, i32
  }
  func.func @transform_4(%arg0: i32) -> (i32, i32) {
    %c0_i32 = arith.constant 0 : i32
    %c0_i32_0 = arith.constant 0 : i32
    %c0_i32_1 = arith.constant 0 : i32
    return %c0_i32, %c0_i32_0 : i32, i32
  }
  func.func @transform_5(%arg0: i32) -> (i32, i32) {
    %c0_i32 = arith.constant 0 : i32
    %c0_i32_0 = arith.constant 0 : i32
    %c0_i32_1 = arith.constant 0 : i32
    return %c0_i32, %c0_i32_0 : i32, i32
  }
  func.func @transform_6(%arg0: i32) -> (i32, i32, i32) {
    %c0_i32 = arith.constant 0 : i32
    %c0_i32_0 = arith.constant 0 : i32
    %c0_i32_1 = arith.constant 0 : i32
    return %arg0, %c0_i32, %c0_i32_0 : i32, i32, i32
  }
}

</mosaic_0001>

<llo_original>
// kernel: tpu_custom_call.1
$region0: #{tpu_custom_call.1}
  #allocation0 [shape = 'u32[]', space=smem, size = 0x4, offset = 0x4, fixed_abs, tag = 'smem constant byte address 0x4 - core index']
  #allocation1 [shape = 'u32[144,128]{1,0:T(1,128)}', space=vmem, size = 0x12000, scoped, tag = 'internal scratch']
  %s0 = inlined_call_operand.vmem [shape: f32[2,56,32], index: 0, kind: input, shape index: {}]
  %s1 = inlined_call_operand.vmem [shape: f32[160,24], index: 1, kind: input, shape index: {}]
  %s2 = inlined_call_operand.vmem [shape: f32[1,24], index: 2, kind: input, shape index: {}]
  %s3 = inlined_call_operand.vmem [shape: f32[24,24], index: 3, kind: input, shape index: {}]
  %s4 = inlined_call_operand.vmem [shape: f32[24,64], index: 4, kind: input, shape index: {}]
  %s5 = inlined_call_operand.vmem [shape: f32[1,64], index: 5, kind: input, shape index: {}]
  %s6 = inlined_call_operand.hbm [shape: f32[2,2,64], index: 6, kind: output, shape index: {}]
  %s7 = sld [smem:[#allocation0]]
  $region57: #{tpu_custom_call.1} parent=0
    _
  %s9 = ssub.s32 1, %s7
  %s10 = scalar_select 0, %s9, %s7
  $region1: #{tpu_custom_call.1} parent=0
    #allocation2 [shape = 'u8[2048]{0}', space=vmem, size = 0x800, scoped, tag = 'output window, operand 0']
    #allocation3 [shape = 's32[2]{0}', space=sflag, size = 0x8, scoped, tag = 'scoped memory for tpu_custom_call.1']
    %11 = vsyncpa [#allocation3], 0
    %s12 = scalar_lea.sflag [#allocation3], 1
    %13 = vsyncpa %s12, 0
    loop: start=0, step=1, limit=4
    $region2: #{tpu_custom_call.1} parent=1 // loop_pre_header
      _
    $region3: #{tpu_custom_call.1} parent=1 // loop_header
      %s15 = sphi 0, %s19
      %p16 = scmp.ge.s32.totalorder %s15, 4
      %s25 = sphi 0, %s27
      %s28 = sphi 0, %s25
      %s29 = sphi 0, %s28
      %s45 = sphi 0, %s29
      %s49 = sphi 0, %s49
      %s51 = sphi 0, %s49
      %s52 = sphi 0, %s51
      %s66 = sphi 0, %s52
      %s70 = sphi 0, %s70
      %s72 = sphi 0, %s70
      %s73 = sphi 0, %s72
      %s87 = sphi 0, %s73
      %s91 = sphi 0, %s91
      %s93 = sphi 0, %s91
      %s94 = sphi 0, %s93
      %s108 = sphi 0, %s94
      %s112 = sphi 0, %s112
      %s114 = sphi 0, %s112
      %s115 = sphi 0, %s114
      %s129 = sphi 0, %s115
      %s133 = sphi 0, %s133
      %s135 = sphi 0, %s133
      %s136 = sphi 0, %s135
      %s150 = sphi 0, %s136
      %s156 = sphi 0, %s158
      %s159 = sphi 0, %s156
      %s160 = sphi 0, %s159
      %s176 = sphi 0, %s160
    $region4: #{tpu_custom_call.1} parent=1 // loop_header_branch
      %18 = sbr.rel (%p16) target = $region8
    $region5: #{tpu_custom_call.1} parent=1 // loop_body
      %s20 = ssub.s32 %s15, 1
      %s21 = ssub.s32 %s15, 2
      %s22 = sadd.s32 %s15, 1
      %s23 = ssub.s32 %s15, %s22
      %p24 = scmp.eq.s32.totalorder %s23, 0
      %s26 = sadd.s32 %s25, 1
      %s27 = scalar_select %p24, %s25, %s26
      %p30 = pneg %p24
      %p31 = scmp.eq.s32.totalorder %s15, 1
      %p32 = por %p30, %p31
      %p33 = scmp.ne.s32.totalorder %s25, %s28
      %p34 = scmp.eq.s32.totalorder %s15, 0
      %p35 = por %p33, %p34
      %p36 = scmp.ne.s32.totalorder %s25, %s28
      %p37 = scmp.eq.s32.totalorder %s20, 1
      %p38 = por %p36, %p37
      %p39 = scmp.ne.s32.totalorder %s28, %s29
      %p40 = scmp.eq.s32.totalorder %s20, 0
      %p41 = por %p39, %p40
      %p42 = scmp.ne.s32.totalorder %s28, %s29
      %p43 = scmp.eq.s32.totalorder %s21, 1
      %p44 = por %p42, %p43
      %p46 = scmp.ne.s32.totalorder %s29, %s45
      %p47 = scmp.eq.s32.totalorder %s21, 0
      %p48 = por %p46, %p47
      %s50 = sadd.s32 %s49, 1
      %p53 = scmp.eq.s32.totalorder %s15, 1
      %p54 = scmp.ne.s32.totalorder %s49, %s51
      %p55 = scmp.eq.s32.totalorder %s15, 0
      %p56 = por %p54, %p55
      %p57 = scmp.ne.s32.totalorder %s49, %s51
      %p58 = scmp.eq.s32.totalorder %s20, 1
      %p59 = por %p57, %p58
      %p60 = scmp.ne.s32.totalorder %s51, %s52
      %p61 = scmp.eq.s32.totalorder %s20, 0
      %p62 = por %p60, %p61
      %p63 = scmp.ne.s32.totalorder %s51, %s52
      %p64 = scmp.eq.s32.totalorder %s21, 1
      %p65 = por %p63, %p64
      %p67 = scmp.ne.s32.totalorder %s52, %s66
      %p68 = scmp.eq.s32.totalorder %s21, 0
      %p69 = por %p67, %p68
      %s71 = sadd.s32 %s70, 1
      %p74 = scmp.eq.s32.totalorder %s15, 1
      %p75 = scmp.ne.s32.totalorder %s70, %s72
      %p76 = scmp.eq.s32.totalorder %s15, 0
      %p77 = por %p75, %p76
      %p78 = scmp.ne.s32.totalorder %s70, %s72
      %p79 = scmp.eq.s32.totalorder %s20, 1
      %p80 = por %p78, %p79
      %p81 = scmp.ne.s32.totalorder %s72, %s73
      %p82 = scmp.eq.s32.totalorder %s20, 0
      %p83 = por %p81, %p82
      %p84 = scmp.ne.s32.totalorder %s72, %s73
      %p85 = scmp.eq.s32.totalorder %s21, 1
      %p86 = por %p84, %p85
      %p88 = scmp.ne.s32.totalorder %s73, %s87
      %p89 = scmp.eq.s32.totalorder %s21, 0
      %p90 = por %p88, %p89
      %s92 = sadd.s32 %s91, 1
      %p95 = scmp.eq.s32.totalorder %s15, 1
      %p96 = scmp.ne.s32.totalorder %s91, %s93
      %p97 = scmp.eq.s32.totalorder %s15, 0
      %p98 = por %p96, %p97
      %p99 = scmp.ne.s32.totalorder %s91, %s93
      %p100 = scmp.eq.s32.totalorder %s20, 1
      %p101 = por %p99, %p100
      %p102 = scmp.ne.s32.totalorder %s93, %s94
      %p103 = scmp.eq.s32.totalorder %s20, 0
      %p104 = por %p102, %p103
      %p105 = scmp.ne.s32.totalorder %s93, %s94
      %p106 = scmp.eq.s32.totalorder %s21, 1
      %p107 = por %p105, %p106
      %p109 = scmp.ne.s32.totalorder %s94, %s108
      %p110 = scmp.eq.s32.totalorder %s21, 0
      %p111 = por %p109, %p110
      %s113 = sadd.s32 %s112, 1
      %p116 = scmp.eq.s32.totalorder %s15, 1
      %p117 = scmp.ne.s32.totalorder %s112, %s114
      %p118 = scmp.eq.s32.totalorder %s15, 0
      %p119 = por %p117, %p118
      %p120 = scmp.ne.s32.totalorder %s112, %s114
      %p121 = scmp.eq.s32.totalorder %s20, 1
      %p122 = por %p120, %p121
      %p123 = scmp.ne.s32.totalorder %s114, %s115
      %p124 = scmp.eq.s32.totalorder %s20, 0
      %p125 = por %p123, %p124
      %p126 = scmp.ne.s32.totalorder %s114, %s115
      %p127 = scmp.eq.s32.totalorder %s21, 1
      %p128 = por %p126, %p127
      %p130 = scmp.ne.s32.totalorder %s115, %s129
      %p131 = scmp.eq.s32.totalorder %s21, 0
      %p132 = por %p130, %p131
      %s134 = sadd.s32 %s133, 1
      %p137 = scmp.eq.s32.totalorder %s15, 1
      %p138 = scmp.ne.s32.totalorder %s133, %s135
      %p139 = scmp.eq.s32.totalorder %s15, 0
      %p140 = por %p138, %p139
      %p141 = scmp.ne.s32.totalorder %s133, %s135
      %p142 = scmp.eq.s32.totalorder %s20, 1
      %p143 = por %p141, %p142
      %p144 = scmp.ne.s32.totalorder %s135, %s136
      %p145 = scmp.eq.s32.totalorder %s20, 0
      %p146 = por %p144, %p145
      %p147 = scmp.ne.s32.totalorder %s135, %s136
      %p148 = scmp.eq.s32.totalorder %s21, 1
      %p149 = por %p147, %p148
      %p151 = scmp.ne.s32.totalorder %s136, %s150
      %p152 = scmp.eq.s32.totalorder %s21, 0
      %p153 = por %p151, %p152
      %s154 = ssub.s32 %s15, %s22
      %p155 = scmp.eq.s32.totalorder %s154, 0
      %s157 = sadd.s32 %s156, 1
      %s158 = scalar_select %p155, %s156, %s157
      %p161 = pneg %p155
      %p162 = scmp.eq.s32.totalorder %s15, 1
      %p163 = por %p161, %p162
      %p164 = scmp.ne.s32.totalorder %s156, %s159
      %p165 = scmp.eq.s32.totalorder %s15, 0
      %p166 = por %p164, %p165
      %p167 = scmp.ne.s32.totalorder %s156, %s159
      %p168 = scmp.eq.s32.totalorder %s20, 1
      %p169 = por %p167, %p168
      %p170 = scmp.ne.s32.totalorder %s159, %s160
      %p171 = scmp.eq.s32.totalorder %s20, 0
      %p172 = por %p170, %p171
      %p173 = scmp.ne.s32.totalorder %s159, %s160
      %p174 = scmp.eq.s32.totalorder %s21, 1
      %p175 = por %p173, %p174
      %p177 = scmp.ne.s32.totalorder %s160, %s176
      %p178 = scmp.eq.s32.totalorder %s21, 0
      %p179 = por %p177, %p178
      %p180 = scmp.le.s32.totalorder 1, %s15
      %p181 = scmp.lt.s32.totalorder %s15, 3
      %p182 = pnand %p180, %p181
      %p183 = pneg %p182
      // Predicated region
      $region9: #{tpu_custom_call.1} parent=5 // pred_check
        _
      $region10: #{tpu_custom_call.1} parent=5 // pred_check_branch
        %185 = sbr.rel (%p182) target = $region12
      $region11: #{tpu_custom_call.1} parent=5 // pred_region
        %s186 = ssub.s32 %s15, 1
        // Predicated region
        $region13: #{tpu_custom_call.1} parent=11 // pred_check
          %p187 = pneg %p62
        $region14: #{tpu_custom_call.1} parent=11 // pred_check_branch
          %189 = sbr.rel (%p187) target = $region16
        $region15: #{tpu_custom_call.1} parent=11 // pred_region
          _
        $region16: #{tpu_custom_call.1} parent=11 // pred_fallthru
          _
        // Predicated region
        $region17: #{tpu_custom_call.1} parent=11 // pred_check
          %p190 = pneg %p83
        $region18: #{tpu_custom_call.1} parent=11 // pred_check_branch
          %192 = sbr.rel (%p190) target = $region20
        $region19: #{tpu_custom_call.1} parent=11 // pred_region
          _
        $region20: #{tpu_custom_call.1} parent=11 // pred_fallthru
          _
        // Predicated region
        $region21: #{tpu_custom_call.1} parent=11 // pred_check
          %p193 = pneg %p104
        $region22: #{tpu_custom_call.1} parent=11 // pred_check_branch
          %195 = sbr.rel (%p193) target = $region24
        $region23: #{tpu_custom_call.1} parent=11 // pred_region
          _
        $region24: #{tpu_custom_call.1} parent=11 // pred_fallthru
          _
        // Predicated region
        $region25: #{tpu_custom_call.1} parent=11 // pred_check
          %p196 = pneg %p125
        $region26: #{tpu_custom_call.1} parent=11 // pred_check_branch
          %198 = sbr.rel (%p196) target = $region28
        $region27: #{tpu_custom_call.1} parent=11 // pred_region
          _
        $region28: #{tpu_custom_call.1} parent=11 // pred_fallthru
          _
        // Predicated region
        $region29: #{tpu_custom_call.1} parent=11 // pred_check
          %p199 = pneg %p146
        $region30: #{tpu_custom_call.1} parent=11 // pred_check_branch
          %201 = sbr.rel (%p199) target = $region32
        $region31: #{tpu_custom_call.1} parent=11 // pred_region
          _
        $region32: #{tpu_custom_call.1} parent=11 // pred_fallthru
          _
      $region12: #{tpu_custom_call.1} parent=5 // pred_fallthru
        _
      %p202 = scmp.lt.s32.totalorder %s15, 2
      // Predicated region
      $region33: #{tpu_custom_call.1} parent=5 // pred_check
        %p203 = pneg %p202
      $region34: #{tpu_custom_call.1} parent=5 // pred_check_branch
        %205 = sbr.rel (%p203) target = $region36
      $region35: #{tpu_custom_call.1} parent=5 // pred_region
        // Predicated region
        $region37: #{tpu_custom_call.1} parent=35 // pred_check
          %p206 = pneg %p35
        $region38: #{tpu_custom_call.1} parent=35 // pred_check_branch
          %208 = sbr.rel (%p206) target = $region40
        $region39: #{tpu_custom_call.1} parent=35 // pred_region
          %p209 = scmp.lt.s32.totalorder %s15, 1
          %s210 = scalar_select %p209, %s15, 1
          %s211 = smul.addr %s210, 7
          %s212 = smul.addr %s211, 8
          %s213 = scalar_lea.vmem %s0, %s212
        $region40: #{tpu_custom_call.1} parent=35 // pred_fallthru
          _
      $region36: #{tpu_custom_call.1} parent=5 // pred_fallthru
        _
      %p214 = scmp.le.s32.totalorder 1, %s15
      %p215 = scmp.lt.s32.totalorder %s15, 3
      %p216 = pnand %p214, %p215
      %p217 = pneg %p216
      // Predicated region
      $region41: #{tpu_custom_call.1} parent=5 // pred_check
        _
      $region42: #{tpu_custom_call.1} parent=5 // pred_check_branch
        %219 = sbr.rel (%p216) target = $region44
      $region43: #{tpu_custom_call.1} parent=5 // pred_region
        %s220 = ssub.s32 %s15, 1
        %p221 = scmp.lt.s32.totalorder %s20, 1
        %s222 = scalar_select %p221, %s20, 1
        %s223 = smul.addr %s222, 7
        %s224 = smul.addr %s223, 8
        %s225 = scalar_lea.vmem %s0, %s224
        %p226 = pneg %p41
        %p227 = pneg %p38
        %p228 = pneg %p62
        %p229 = pneg %p59
        %p230 = pneg %p83
        %p231 = pneg %p80
        %p232 = pneg %p104
        %p233 = pneg %p101
        %p234 = pneg %p125
        %p235 = pneg %p122
        %p236 = pneg %p146
        %p237 = pneg %p143
        %p238 = pneg %p172
        %p239 = pneg %p169
        %s240 = sand.u32 %s159, 1
        %s241 = scalar_lea.sflag [#allocation3], %s240
        %s242 = sand.u32 %s159, 1
        %s243 = smul.addr %s242, 2
        %s244 = scalar_lea.vmem [#allocation2], %s243
        %p245 = scmp.lt.s32.totalorder %s20, 1
        %s246 = scalar_select %p245, %s20, 1
        %s247 = smul.addr %s246, 7
        %s248 = smul.addr %s247, 8
        %s249 = scalar_lea.vmem %s0, %s248
        %v250 = vld [vmem:[%s249] sm:$0xff]
        %v251 = vld [vmem:[%s249 + $0x8] sm:$0xff]
        %v252 = vld [vmem:[%s249 + $0x10] sm:$0xff]
        %v253 = vld [vmem:[%s249 + $0x18] sm:$0xff]
        %v254 = vld [vmem:[%s249 + $0x20] sm:$0xff]
        %v255 = vld [vmem:[%s249 + $0x28] sm:$0xff]
        %v256 = vld [vmem:[%s249 + $0x1] sm:$0xff]
        %v257 = vld [vmem:[%s249 + $0x9] sm:$0xff]
        %v258 = vld [vmem:[%s249 + $0x11] sm:$0xff]
        %v259 = vld [vmem:[%s249 + $0x19] sm:$0xff]
        %v260 = vld [vmem:[%s249 + $0x21] sm:$0xff]
        %v261 = vld [vmem:[%s249 + $0x29] sm:$0xff]
        %v262 = vld [vmem:[%s249 + $0x2] sm:$0xff]
        %v263 = vld [vmem:[%s249 + $0xa] sm:$0xff]
        %v264 = vld [vmem:[%s249 + $0x12] sm:$0xff]
        %v265 = vld [vmem:[%s249 + $0x1a] sm:$0xff]
        %v266 = vld [vmem:[%s249 + $0x22] sm:$0xff]
        %v267 = vld [vmem:[%s249 + $0x2a] sm:$0xff]
        %v268 = vld [vmem:[%s249 + $0x3] sm:$0xff]
        %v269 = vld [vmem:[%s249 + $0xb] sm:$0xff]
        %v270 = vld [vmem:[%s249 + $0x13] sm:$0xff]
        %v271 = vld [vmem:[%s249 + $0x1b] sm:$0xff]
        %v272 = vld [vmem:[%s249 + $0x23] sm:$0xff]
        %v273 = vld [vmem:[%s249 + $0x2b] sm:$0xff]
        %v274 = vld [vmem:[%s249 + $0x4] sm:$0xff]
        %v275 = vld [vmem:[%s249 + $0xc] sm:$0xff]
        %v276 = vld [vmem:[%s249 + $0x14] sm:$0xff]
        %v277 = vld [vmem:[%s249 + $0x1c] sm:$0xff]
        %v278 = vld [vmem:[%s249 + $0x24] sm:$0xff]
        %v279 = vld [vmem:[%s249 + $0x2c] sm:$0xff]
        %286 = vrot.lane.b32.xlu0 %v256, 32
        %v287 = vpop.permute.xlu0 %286
        %288 = vrot.lane.b32.xlu0 %v257, 32
        %v289 = vpop.permute.xlu0 %288
        %290 = vrot.lane.b32.xlu0 %v258, 32
        %v291 = vpop.permute.xlu0 %290
        %292 = vrot.lane.b32.xlu0 %v259, 32
        %v293 = vpop.permute.xlu0 %292
        %294 = vrot.lane.b32.xlu0 %v260, 32
        %v295 = vpop.permute.xlu0 %294
        %296 = vrot.lane.b32.xlu0 %v261, 32
        %v297 = vpop.permute.xlu0 %296
        %310 = vrot.lane.b32.xlu0 %v262, 64
        %v311 = vpop.permute.xlu0 %310
        %312 = vrot.lane.b32.xlu0 %v263, 64
        %v313 = vpop.permute.xlu0 %312
        %314 = vrot.lane.b32.xlu0 %v264, 64
        %v315 = vpop.permute.xlu0 %314
        %316 = vrot.lane.b32.xlu0 %v265, 64
        %v317 = vpop.permute.xlu0 %316
        %318 = vrot.lane.b32.xlu0 %v266, 64
        %v319 = vpop.permute.xlu0 %318
        %320 = vrot.lane.b32.xlu0 %v267, 64
        %v321 = vpop.permute.xlu0 %320
        %334 = vrot.lane.b32.xlu0 %v268, 96
        %v335 = vpop.permute.xlu0 %334
        %336 = vrot.lane.b32.xlu0 %v269, 96
        %v337 = vpop.permute.xlu0 %336
        %338 = vrot.lane.b32.xlu0 %v270, 96
        %v339 = vpop.permute.xlu0 %338
        %340 = vrot.lane.b32.xlu0 %v271, 96
        %v341 = vpop.permute.xlu0 %340
        %342 = vrot.lane.b32.xlu0 %v272, 96
        %v343 = vpop.permute.xlu0 %342
        %344 = vrot.lane.b32.xlu0 %v273, 96
        %v345 = vpop.permute.xlu0 %344
        %vm352 = vcmask 261120
        %v353 = vsel %vm352, %v250, %v287
        %v354 = vsel %vm352, %v251, %v289
        %v355 = vsel %vm352, %v252, %v291
        %v356 = vsel %vm352, %v253, %v293
        %v357 = vsel %vm352, %v254, %v295
        %v358 = vsel %vm352, %v255, %v297
        %vm359 = vcmask 523264
        %v360 = vsel %vm359, %v353, %v311
        %v361 = vsel %vm359, %v354, %v313
        %v362 = vsel %vm359, %v355, %v315
        %v363 = vsel %vm359, %v356, %v317
        %v364 = vsel %vm359, %v357, %v319
        %v365 = vsel %vm359, %v358, %v321
        %vm366 = vcmask 785408
        %v367 = vsel %vm366, %v360, %v335
        %v368 = vsel %vm366, %v361, %v337
        %v369 = vsel %vm366, %v362, %v339
        %v370 = vsel %vm366, %v363, %v341
        %v371 = vsel %vm366, %v364, %v343
        %v372 = vsel %vm366, %v365, %v345
        %v373 = vld [vmem:[%s1] sm:$0xff]
        %v374 = vld [vmem:[%s1 + $0x8] sm:$0xff]
        %v375 = vld [vmem:[%s1 + $0x10] sm:$0xff]
        %v376 = vld [vmem:[%s1 + $0x18] sm:$0xff]
        %v377 = vld [vmem:[%s1 + $0x20] sm:$0xff]
        %v378 = vld [vmem:[%s1 + $0x28] sm:$0xff]
        %v379 = vld [vmem:[%s1 + $0x30] sm:$0xff]
        %v380 = vld [vmem:[%s1 + $0x38] sm:$0xff]
        %v381 = vld [vmem:[%s1 + $0x40] sm:$0xff]
        %v382 = vld [vmem:[%s1 + $0x48] sm:$0xff]
        %v383 = vld [vmem:[%s1 + $0x50] sm:$0xff]
        %v384 = vld [vmem:[%s1 + $0x58] sm:$0xff]
        %v385 = vld [vmem:[%s1 + $0x60] sm:$0xff]
        %v386 = vld [vmem:[%s1 + $0x68] sm:$0xff]
        %v387 = vld [vmem:[%s1 + $0x70] sm:$0xff]
        %v388 = vld [vmem:[%s1 + $0x78] sm:$0xff]
        %v389 = vld [vmem:[%s1 + $0x80] sm:$0xff]
        %v390 = vld [vmem:[%s1 + $0x88] sm:$0xff]
        %v391 = vld [vmem:[%s1 + $0x90] sm:$0xff]
        %v392 = vld [vmem:[%s1 + $0x98] sm:$0xff]
        %v394 = vsel %vm352, %v274, 0
        %v397 = vsel %vm352, %v275, 0
        %v400 = vsel %vm352, %v276, 0
        %v403 = vsel %vm352, %v277, 0
        %v406 = vsel %vm352, %v278, 0
        %v409 = vsel %vm352, %v279, 0
        %411 = vmatprep.subr.mxu0 0.0
        %412 = vmatpush1.msra.mxu0 %v388
        %413 = vmatprep.subr.mxu0 0.0
        %414 = vmatpush1.msra.mxu0 %v387
        %415 = vmatprep.subr.mxu0 0.0
        %416 = vmatpush1.msra.mxu0 %v386
        %417 = vmatprep.subr.mxu0 0.0
        %418 = vmatpush1.msra.mxu0 %v385
        %419 = vmatprep.subr.mxu0 0.0
        %420 = vmatpush1.msra.mxu0 %v384
        %421 = vmatprep.subr.mxu0 0.0
        %422 = vmatpush1.msra.mxu0 %v383
        %423 = vmatprep.subr.mxu0 0.0
        %424 = vmatpush1.msra.mxu0 %v382
        %425 = vmatprep.subr.mxu0 0.0
        %426 = vmatpush1.msra.mxu0 %v381
        %427 = vmatprep.subr.mxu0 0.0
        %428 = vmatpush1.msra.mxu0 %v380
        %429 = vmatprep.subr.mxu0 0.0
        %430 = vmatpush1.msra.mxu0 %v379
        %431 = vmatprep.subr.mxu0 0.0
        %432 = vmatpush1.msra.mxu0 %v378
        %433 = vmatprep.subr.mxu0 0.0
        %434 = vmatpush1.msra.mxu0 %v377
        %435 = vmatprep.subr.mxu0 0.0
        %436 = vmatpush1.msra.mxu0 %v376
        %437 = vmatprep.subr.mxu0 0.0
        %438 = vmatpush1.msra.mxu0 %v375
        %439 = vmatprep.subr.mxu0 0.0
        %440 = vmatpush1.msra.mxu0 %v374
        %441 = vmatprep.subr.mxu0 0.0
        %442 = vmatpush1.msra.mxu0 %v373
        %443 = vmatprep.subr.mxu0 0.0
        %444 = vmatpush2.msra.mxu0 0.0
        %445 = vmatprep.subr.mxu0 0.0
        %446 = vmatpush2.msra.mxu0 0.0
        %447 = vmatprep.subr.mxu0 0.0
        %448 = vmatpush2.msra.mxu0 0.0
        %449 = vmatprep.subr.mxu0 0.0
        %450 = vmatpush2.msra.mxu0 0.0
        %451 = vmatprep.subr.mxu0 0.0
        %452 = vmatpush2.msra.mxu0 0.0
        %453 = vmatprep.subr.mxu0 0.0
        %454 = vmatpush2.msra.mxu0 0.0
        %455 = vmatprep.subr.mxu0 0.0
        %456 = vmatpush2.msra.mxu0 0.0
        %457 = vmatprep.subr.mxu0 0.0
        %458 = vmatpush2.msra.mxu0 0.0
        %459 = vmatprep.subr.mxu0 0.0
        %460 = vmatpush2.msra.mxu0 0.0
        %461 = vmatprep.subr.mxu0 0.0
        %462 = vmatpush2.msra.mxu0 0.0
        %463 = vmatprep.subr.mxu0 0.0
        %464 = vmatpush2.msra.mxu0 0.0
        %465 = vmatprep.subr.mxu0 0.0
        %466 = vmatpush2.msra.mxu0 0.0
        %467 = vmatprep.subr.mxu0 0.0
        %468 = vmatpush2.msra.mxu0 %v392
        %469 = vmatprep.subr.mxu0 0.0
        %470 = vmatpush2.msra.mxu0 %v391
        %471 = vmatprep.subr.mxu0 0.0
        %472 = vmatpush2.msra.mxu0 %v390
        %473 = vmatprep.subr.mxu0 0.0
        %474 = vmatpush2.msra.mxu0 %v389
        %475 = vmatprep.mubr.f32.mxu0 %v394
        %476 = vmatmul.mubr.f32.gmra.mxu0 %v367
        %v477 = vpop.f32.mrf.mxu0
        %v478 = vadd.f32 0.0, %v477
        %v479 = vpop.f32.mrf.mxu0
        %480 = vmatprep.mubr.f32.mxu0 %v397
        %481 = vmatmul.mubr.f32.gmra.mxu0 %v368
        %v482 = vpop.f32.mrf.mxu0
        %v483 = vadd.f32 0.0, %v482
        %v484 = vpop.f32.mrf.mxu0
        %485 = vmatprep.mubr.f32.mxu0 %v400
        %486 = vmatmul.mubr.f32.gmra.mxu0 %v369
        %v487 = vpop.f32.mrf.mxu0
        %v488 = vadd.f32 0.0, %v487
        %v489 = vpop.f32.mrf.mxu0
        %490 = vmatprep.mubr.f32.mxu0 %v403
        %491 = vmatmul.mubr.f32.gmra.mxu0 %v370
        %v492 = vpop.f32.mrf.mxu0
        %v493 = vadd.f32 0.0, %v492
        %v494 = vpop.f32.mrf.mxu0
        %495 = vmatprep.mubr.f32.mxu0 %v406
        %496 = vmatmul.mubr.f32.gmra.mxu0 %v371
        %v497 = vpop.f32.mrf.mxu0
        %v498 = vadd.f32 0.0, %v497
        %v499 = vpop.f32.mrf.mxu0
        %500 = vmatprep.mubr.f32.mxu0 %v409
        %501 = vmatmul.mubr.f32.gmra.mxu0 %v372
        %v502 = vpop.f32.mrf.mxu0
        %v503 = vadd.f32 0.0, %v502
        %v504 = vpop.f32.mrf.mxu0
        %505 = vdwg.mxu0
        %v506 = vld [vmem:[%s3] sm:$0xff]
        %v507 = vld [vmem:[%s3 + $0x8] sm:$0xff]
        %v508 = vld [vmem:[%s3 + $0x10] sm:$0xff]
        %v509 = vadd.f32 %v478, %v506
        %v510 = vadd.f32 %v483, %v507
        %v511 = vadd.f32 %v488, %v508
        %vm512 = vcmask 195584
        %v513 = vsel %vm512, %v509, -inf
        %v514 = vsel %vm512, %v510, -inf
        %v515 = vsel %vm512, %v511, -inf
        %v516 = vmax.f32 %v513, %v514
        %v517 = vmax.f32 %v516, %v515
        %v518 = vrot.slane %v517, 4
        %v519 = vmax.f32 %v517, %v518
        %v520 = vrot.slane %v519, 2
        %v521 = vmax.f32 %v519, %v520
        %v522 = vrot.slane %v521, 1
        %v523 = vmax.f32 %v521, %v522
        %v524 = vadd.f32 %v493, %v506
        %v525 = vadd.f32 %v498, %v507
        %v526 = vadd.f32 %v503, %v508
        %v527 = vsel %vm512, %v524, -inf
        %v528 = vsel %vm512, %v525, -inf
        %v529 = vsel %vm512, %v526, -inf
        %v530 = vmax.f32 %v527, %v528
        %v531 = vmax.f32 %v530, %v529
        %v532 = vrot.slane %v531, 4
        %v533 = vmax.f32 %v531, %v532
        %v534 = vrot.slane %v533, 2
        %v535 = vmax.f32 %v533, %v534
        %v536 = vrot.slane %v535, 1
        %v537 = vmax.f32 %v535, %v536
        %vm538 = vcmask 1040384
        %v539 = vsel %vm538, %v523, %v537
        %v540 = vld [vmem:[%s2] sm:$0x1]
        %v542 = vlaneseq
        %v543 = vshrl.u32 %v542, 7
        %v544 = vsub.s32 0, %v543
        %v545 = vrot.slane %v540, %v544
        %v547 = vadd.f32 %v539, %v545
        %v548 = vmax.f32 %v547, 0.0
        %v549 = vld [vmem:[%s4] sm:$0xff]
        %v550 = vld [vmem:[%s4 + $0x8] sm:$0xff]
        %v551 = vld [vmem:[%s4 + $0x10] sm:$0xff]
        %v552 = vld [vmem:[%s5] sm:$0x1]
        %v554 = vlaneseq
        %v555 = vshrl.u32 %v554, 7
        %v556 = vsub.s32 0, %v555
        %v557 = vrot.slane %v552, %v556
        %v560 = vsel %vm512, %v548, 0
        %562 = vmatprep.subr.mxu0 0.0
        %563 = vmatpush1.msra.mxu0 0.0
        %564 = vmatprep.subr.mxu0 0.0
        %565 = vmatpush1.msra.mxu0 0.0
        %566 = vmatprep.subr.mxu0 0.0
        %567 = vmatpush1.msra.mxu0 0.0
        %568 = vmatprep.subr.mxu0 0.0
        %569 = vmatpush1.msra.mxu0 0.0
        %570 = vmatprep.subr.mxu0 0.0
        %571 = vmatpush1.msra.mxu0 0.0
        %572 = vmatprep.subr.mxu0 0.0
        %573 = vmatpush1.msra.mxu0 0.0
        %574 = vmatprep.subr.mxu0 0.0
        %575 = vmatpush1.msra.mxu0 0.0
        %576 = vmatprep.subr.mxu0 0.0
        %577 = vmatpush1.msra.mxu0 0.0
        %578 = vmatprep.subr.mxu0 0.0
        %579 = vmatpush1.msra.mxu0 0.0
        %580 = vmatprep.subr.mxu0 0.0
        %581 = vmatpush1.msra.mxu0 0.0
        %582 = vmatprep.subr.mxu0 0.0
        %583 = vmatpush1.msra.mxu0 0.0
        %584 = vmatprep.subr.mxu0 0.0
        %585 = vmatpush1.msra.mxu0 0.0
        %586 = vmatprep.subr.mxu0 0.0
        %587 = vmatpush1.msra.mxu0 0.0
        %588 = vmatprep.subr.mxu0 0.0
        %589 = vmatpush1.msra.mxu0 %v551
        %590 = vmatprep.subr.mxu0 0.0
        %591 = vmatpush1.msra.mxu0 %v550
        %592 = vmatprep.subr.mxu0 0.0
        %593 = vmatpush1.msra.mxu0 %v549
        %594 = vmatprep.subr.mxu0 0.0
        %595 = vmatpush2.msra.mxu0 0.0
        %596 = vmatprep.subr.mxu0 0.0
        %597 = vmatpush2.msra.mxu0 0.0
        %598 = vmatprep.subr.mxu0 0.0
        %599 = vmatpush2.msra.mxu0 0.0
        %600 = vmatprep.subr.mxu0 0.0
        %601 = vmatpush2.msra.mxu0 0.0
        %602 = vmatprep.subr.mxu0 0.0
        %603 = vmatpush2.msra.mxu0 0.0
        %604 = vmatprep.subr.mxu0 0.0
        %605 = vmatpush2.msra.mxu0 0.0
        %606 = vmatprep.subr.mxu0 0.0
        %607 = vmatpush2.msra.mxu0 0.0
        %608 = vmatprep.subr.mxu0 0.0
        %609 = vmatpush2.msra.mxu0 0.0
        %610 = vmatprep.subr.mxu0 0.0
        %611 = vmatpush2.msra.mxu0 0.0
        %612 = vmatprep.subr.mxu0 0.0
        %613 = vmatpush2.msra.mxu0 0.0
        %614 = vmatprep.subr.mxu0 0.0
        %615 = vmatpush2.msra.mxu0 0.0
        %616 = vmatprep.subr.mxu0 0.0
        %617 = vmatpush2.msra.mxu0 0.0
        %618 = vmatprep.subr.mxu0 0.0
        %619 = vmatpush2.msra.mxu0 0.0
        %620 = vmatprep.subr.mxu0 0.0
        %621 = vmatpush2.msra.mxu0 0.0
        %622 = vmatprep.subr.mxu0 0.0
        %623 = vmatpush2.msra.mxu0 0.0
        %624 = vmatprep.subr.mxu0 0.0
        %625 = vmatpush2.msra.mxu0 0.0
        %626 = vmatprep.mubr.f32.mxu0 0.0
        %627 = vmatmul.mubr.f32.gmra.mxu0 %v560
        %v628 = vpop.f32.mrf.mxu0
        %v629 = vadd.f32 %v557, %v628
        %v630 = vpop.f32.mrf.mxu0
        %631 = vdwg.mxu0
        %v632 = vlaneseq
        %v633 = vand.u32 %v632, 127
        %vm634 = vcmp.lt.s32.totalorder %v633, 32
        %v635 = vmul.f32 %v629, 0.5
        %v636 = vmul.f32 %v635, 1.442695
        %v637 = vpow.pop %v636
        %v638 = vsel %vm634, %v629, %v637
        %vm639 = vcmask 517120
        %640 = vst.msk [vmem:[%s244] sm:$0x3] %vm639, %v638
        %s641 = sand.u32 %s159, 1
        %s642 = scalar_lea.sflag [#allocation3], %s641
        %s643 = sand.u32 %s159, 1
        %s644 = smul.addr %s643, 2
        %s645 = scalar_lea.vmem [#allocation2], %s644
        // Predicated region
        $region45: #{tpu_custom_call.1} parent=43 // pred_check
          %p646 = pneg %p169
        $region46: #{tpu_custom_call.1} parent=43 // pred_check_branch
          %648 = sbr.rel (%p646) target = $region48
        $region47: #{tpu_custom_call.1} parent=43 // pred_region
          %s650 = ssub.s32 32, 32
          %651 = vsyncadd %s642, %s650
          %s652 = smul.addr %s20, 32
          %s653 = scalar_lea.hbm %s6, %s652
          %s655 = sshll.u32 %s645, 4
          %s656 = int_to_ptr.vmem [resolvable:$true] %s655
          %658 = dma.vmem_to_hbm [thread:$0]  %s656, 32, %s653, %s642
        $region48: #{tpu_custom_call.1} parent=43 // pred_fallthru
          _
      $region44: #{tpu_custom_call.1} parent=5 // pred_fallthru
        _
      %p659 = scmp.le.s32.totalorder 2, %s15
      // Predicated region
      $region49: #{tpu_custom_call.1} parent=5 // pred_check
        %p660 = pneg %p659
      $region50: #{tpu_custom_call.1} parent=5 // pred_check_branch
        %662 = sbr.rel (%p660) target = $region52
      $region51: #{tpu_custom_call.1} parent=5 // pred_region
        %s663 = ssub.s32 %s15, 2
        // Predicated region
        $region53: #{tpu_custom_call.1} parent=51 // pred_check
          %p664 = pneg %p175
        $region54: #{tpu_custom_call.1} parent=51 // pred_check_branch
          %666 = sbr.rel (%p664) target = $region56
        $region55: #{tpu_custom_call.1} parent=51 // pred_region
          %s667 = sand.u32 %s160, 1
          %s668 = scalar_lea.sflag [#allocation3], %s667
          %s669 = sand.u32 %s160, 1
          %s670 = smul.addr %s669, 2
          %s671 = scalar_lea.vmem [#allocation2], %s670
          %672 = dma.done %s668, 32
        $region56: #{tpu_custom_call.1} parent=51 // pred_fallthru
          _
      $region52: #{tpu_custom_call.1} parent=5 // pred_fallthru
        _
    $region6: #{tpu_custom_call.1} parent=1 // loop_footer
      %s19 = sadd.s32 1, %s15
    $region7: #{tpu_custom_call.1} parent=1 // loop_footer_branch
      %14 = sbr.rel target = $region3
    $region8: #{tpu_custom_call.1} parent=1 // loop_exit
      _
    %673 = vsyncpa [#allocation3], 1
    %s674 = scalar_lea.sflag [#allocation3], 1
    %675 = vsyncpa %s674, 1

</llo_original>
